<compile_context>
chip_gen: v6e
topology: v6e:2x2x1
jax: 0.10.0
libtpu: 0.0.40
codegen_flags: <defaults>
</compile_context>

<pallas_src>
import math

import jax
import jax.numpy as jnp
from jax.experimental import pallas as pl
from jax.experimental.pallas import tpu as pltpu


_LANES = 128
_TARGET_BLOCK_BYTES = 2 * 1024 * 1024  # ~2 MiB per block (review: 1-4 MiB knee)


def _copy_kernel(x_ref, o_ref):
    # Identity copy of the current (tile_rows, 128) block — the only hot path
    # a materialized reshape has.
    o_ref[...] = x_ref[...]


def _resolve_shape(total: int, shape):
    """Resolve a single -1 entry exactly like torch.Tensor.view does."""
    shape = list(shape)
    if shape.count(-1) > 1:
        raise ValueError("only one dimension can be inferred (-1)")
    if -1 in shape:
        known = math.prod(d for d in shape if d != -1)
        if known == 0 or total % known != 0:
            raise ValueError(f"cannot view {total} elements as shape {tuple(shape)}")
        shape[shape.index(-1)] = total // known
    if math.prod(shape) != total:
        raise ValueError(f"shape {tuple(shape)} invalid for {total} elements")
    return tuple(shape)


def _to_words(flat):
    """Bitcast a 1-D array to uint32 words if cleanly possible, else None."""
    dtype = flat.dtype
    if dtype == jnp.bool_:
        return None
    itemsize = jnp.dtype(dtype).itemsize
    total = flat.shape[0]
    if itemsize == 4:
        return jax.lax.bitcast_convert_type(flat, jnp.uint32)
    if itemsize < 4:
        if 4 % itemsize != 0:
            return None
        pack = 4 // itemsize
        if total % pack != 0:
            return None
        return jax.lax.bitcast_convert_type(
            flat.reshape(total // pack, pack), jnp.uint32)
    if itemsize == 8:
        return jax.lax.bitcast_convert_type(flat, jnp.uint32).reshape(2 * total)
    return None


def _from_words(words, dtype, total):
    """Inverse of `_to_words`."""
    itemsize = jnp.dtype(dtype).itemsize
    if itemsize == 4:
        return jax.lax.bitcast_convert_type(words, dtype)
    if itemsize < 4:
        return jax.lax.bitcast_convert_type(words, dtype).reshape(total)
    # itemsize == 8
    return jax.lax.bitcast_convert_type(words.reshape(total, 2), dtype)


def _copy_flat(flat):
    """Stream a 1-D array through a lane-dense Pallas copy kernel."""
    total = flat.shape[0]
    dtype = flat.dtype
    itemsize = jnp.dtype(dtype).itemsize

    rows = pl.cdiv(total, _LANES)
    padded = rows * _LANES
    if padded != total:
        # Rare tail case: pad up to a lane-dense slab, slice back after.
        flat = jnp.pad(flat, (0, padded - total))
    slab = flat.reshape(rows, _LANES)

    # dtype-aware sublane multiple: f32 -> 8, bf16 -> 16, int8 -> 32.
    sub = 8 * max(1, 4 // itemsize)
    cap_rows = max(sub, (_TARGET_BLOCK_BYTES // (_LANES * itemsize)) // sub * sub)

    if rows <= cap_rows:
        # Single full-extent block (exempt from the (8,128) divisibility rule).
        tile_rows = rows
    else:
        tile_rows = cap_rows
    grid = (pl.cdiv(rows, tile_rows),)

    out = pl.pallas_call(
        _copy_kernel,
        out_shape=jax.ShapeDtypeStruct((rows, _LANES), dtype),
        grid_spec=pltpu.PrefetchScalarGridSpec(
            num_scalar_prefetch=0,
            grid=grid,
            in_specs=[pl.BlockSpec((tile_rows, _LANES), lambda i: (i, 0))],
            out_specs=pl.BlockSpec((tile_rows, _LANES), lambda i: (i, 0)),
        ),
        compiler_params=pltpu.CompilerParams(
            dimension_semantics=("parallel",),  # sharded across v7x's 2 TCs
            vmem_limit_bytes=32 * 1024 * 1024,  # 2 bufs in + 2 out ~ 8 MiB used
        ),
        cost_estimate=pl.CostEstimate(
            flops=0,
            transcendentals=0,
            bytes_accessed=2 * padded * itemsize,
        ),
    )(slab)

    out_flat = out.reshape(padded)
    if padded != total:
        out_flat = out_flat[:total]
    return out_flat


def pallas_view(x, *shape):
    """Equivalent of torch View(*shape): returns x reshaped to `shape`."""
    total = x.size
    out_shape = _resolve_shape(total, shape)
    if total == 0:
        return x.reshape(out_shape)

    flat = x.reshape(total)
    words = _to_words(flat)
    if words is not None:
        out_flat = _from_words(_copy_flat(words), x.dtype, total)
    else:
        out_flat = _copy_flat(flat)
    return out_flat.reshape(out_shape)


class View:
    """JAX/Pallas mirror of the PyTorch View module."""

    def __init__(self, *shape):
        self.shape = shape

    def __call__(self, x):
        return pallas_view(x, *self.shape)


if __name__ == "__main__":
    key = jax.random.PRNGKey(0)

    # Input analogous to an NCHW conv feature map: (batch=2, C=4, H=16, W=16).
    x = jax.random.normal(key, (2, 4, 16, 16), dtype=jnp.float32)

    # View(-1, 16, 16): 2*4*16*16 = 2048 elements -> (8, 16, 16)
    view = View(-1, 16, 16)
    y = jax.block_until_ready(view(x))
    y_ref = x.reshape(-1, 16, 16)
    assert y.shape == y_ref.shape and y.dtype == y_ref.dtype
    assert bool(jnp.array_equal(y, y_ref))

    # bf16 input exercises the pack-to-u32 path (2 elements per 32-bit word).
    x_bf16 = x.astype(jnp.bfloat16)
    y_bf16 = jax.block_until_ready(View(2, -1)(x_bf16))
    assert y_bf16.shape == (2, 1024) and y_bf16.dtype == jnp.bfloat16
    assert bool(jnp.array_equal(y_bf16, x_bf16.reshape(2, -1)))

    # Element count not a multiple of 128 exercises the padded-tail path.
    x_small = jax.random.normal(key, (2, 3, 5), dtype=jnp.float32)
    y_small = jax.block_until_ready(View(5, -1)(x_small))
    assert bool(jnp.array_equal(y_small, x_small.reshape(5, -1)))

    print("KERNEL_OK")
</pallas_src>

<mosaic_0001>
module attributes {stable_mosaic.version = 11 : i64} {
  func.func @_copy_kernel(%arg0: i32, %arg1: memref<16x128xi32, #tpu.memory_space<vmem>>, %arg2: memref<16x128xi32, #tpu.memory_space<vmem>>) attributes {dimension_semantics = [#tpu.dimension_semantics<parallel>], iteration_bounds = array<i64: 1>, scalar_prefetch = 0 : i64, scratch_operands = 0 : i64, tpu.core_type = #tpu.core_type<tc>, window_params = [{transform_indices = @transform_0, window_bounds = array<i64: 16, 128>}, {transform_indices = @transform_1, window_bounds = array<i64: 16, 128>}]} {
    %c0 = arith.constant 0 : index
    %c0_0 = arith.constant 0 : index
    %0 = vector.load %arg1[%c0, %c0_0] : memref<16x128xi32, #tpu.memory_space<vmem>>, vector<16x128xi32>
    %c0_1 = arith.constant 0 : index
    %c0_2 = arith.constant 0 : index
    %1 = vector.load %arg2[%c0_1, %c0_2] : memref<16x128xi32, #tpu.memory_space<vmem>>, vector<16x128xi32>
    tpu.vector_store %arg2[%c0_1, %c0_2], %0 {strides = array<i32>} : memref<16x128xi32, #tpu.memory_space<vmem>>, vector<16x128xi32>,
    return
  }
  func.func @transform_0(%arg0: i32) -> (i32, i32) {
    %c0_i32 = arith.constant 0 : i32
    %c0_i32_0 = arith.constant 0 : i32
    return %arg0, %c0_i32 : i32, i32
  }
  func.func @transform_1(%arg0: i32) -> (i32, i32) {
    %c0_i32 = arith.constant 0 : i32
    %c0_i32_0 = arith.constant 0 : i32
    return %arg0, %c0_i32 : i32, i32
  }
}

</mosaic_0001>

<llo_original>
// kernel: tpu_custom_call.1
$region0: #{tpu_custom_call.1}
  #allocation0 [shape = 'u32[]', space=smem, size = 0x4, offset = 0x4, fixed_abs, tag = 'smem constant byte address 0x4 - core index']
  #allocation1 [shape = 'u32[144,128]{1,0:T(1,128)}', space=vmem, size = 0x12000, scoped, tag = 'internal scratch']
  %s0 = inlined_call_operand.hbm [shape: u32[16,128], index: 0, kind: input, shape index: {}]
  %s1 = inlined_call_operand.hbm [shape: u32[16,128], index: 1, kind: output, shape index: {}]
  %s2 = sld [smem:[#allocation0]]
  $region18: #{tpu_custom_call.1} parent=0
    _
  %s4 = ssub.s32 1, %s2
  %s5 = scalar_select 0, %s4, %s2
  $region1: #{tpu_custom_call.1} parent=0
    #allocation2 [shape = 'u8[8192]{0}', space=vmem, size = 0x2000, scoped, tag = 'input window, operand 0, single buffered']
    #allocation3 [shape = 's32[1]{0}', space=sflag, size = 0x4, scoped, tag = 'scoped memory for tpu_custom_call.1']
    #allocation4 [shape = 's32[1]{0}', space=sflag, size = 0x4, scoped, tag = 'scoped memory for tpu_custom_call.1']
    #allocation5 [shape = 'u8[8192]{0}', space=vmem, size = 0x2000, scoped, tag = 'output window, operand 0, single buffered']
    %6 = vsyncpa [#allocation3], 0
    %7 = vsyncpa [#allocation4], 0
    // Predicated region
    $region2: #{tpu_custom_call.1} parent=1 // pred_check
      _
    $region3: #{tpu_custom_call.1} parent=1 // pred_check_branch
      %9 = sbr.rel (0) target = $region5
    $region4: #{tpu_custom_call.1} parent=1 // pred_region
      %s11 = ssub.s32 256, 256
      %12 = vsyncadd [#allocation3], %s11
      %s13 = sshll.u32 [#allocation2], 4
      %s14 = int_to_ptr.vmem [resolvable:$true] %s13
      %19 = dma.hbm_to_vmem [thread:$0]  %s0, 256, %s14, [#allocation3], 128, 128, 8
    $region5: #{tpu_custom_call.1} parent=1 // pred_fallthru
      _
    // Predicated region
    $region6: #{tpu_custom_call.1} parent=1 // pred_check
      _
    $region7: #{tpu_custom_call.1} parent=1 // pred_check_branch
      %21 = sbr.rel (0) target = $region9
    $region8: #{tpu_custom_call.1} parent=1 // pred_region
      %22 = dma.done [#allocation3], 256
    $region9: #{tpu_custom_call.1} parent=1 // pred_fallthru
      _
    %v23 = vld [vmem:[#allocation2] sm:$0xff]
    %v24 = vld [vmem:[#allocation2 + $0x8] sm:$0xff]
    %25 = vst [vmem:[#allocation5] sm:$0xff] %v23
    %26 = vst [vmem:[#allocation5 + $0x8] sm:$0xff] %v24
    // Predicated region
    $region10: #{tpu_custom_call.1} parent=1 // pred_check
      _
    $region11: #{tpu_custom_call.1} parent=1 // pred_check_branch
      %28 = sbr.rel (0) target = $region13
    $region12: #{tpu_custom_call.1} parent=1 // pred_region
      %s30 = ssub.s32 256, 256
      %31 = vsyncadd [#allocation4], %s30
      %s32 = sshll.u32 [#allocation5], 4
      %s33 = int_to_ptr.vmem [resolvable:$true] %s32
      %38 = dma.vmem_to_hbm [thread:$0]  %s33, 256, %s1, [#allocation4], 128, 128, 8
    $region13: #{tpu_custom_call.1} parent=1 // pred_fallthru
      _
    // Predicated region
    $region14: #{tpu_custom_call.1} parent=1 // pred_check
      _
    $region15: #{tpu_custom_call.1} parent=1 // pred_check_branch
      %40 = sbr.rel (0) target = $region17
    $region16: #{tpu_custom_call.1} parent=1 // pred_region
      %41 = dma.done [#allocation4], 256
    $region17: #{tpu_custom_call.1} parent=1 // pred_fallthru
      _
    %42 = vsyncpa [#allocation3], 1
    %43 = vsyncpa [#allocation4], 1

</llo_original>
